<compile_context>
chip_gen: v6e
topology: v6e:2x2x1
jax: 0.10.0
libtpu: 0.0.40
codegen_flags: <defaults>
</compile_context>

<pallas_src>
import math
import functools

import jax
import jax.numpy as jnp
from jax import lax
from jax.experimental import pallas as pl
from jax.experimental.pallas import tpu as pltpu


def _lff_kernel(x_ref, w_ref, o_ref):
    # x_ref: (Bblk, C, L)   w_ref: (lens, C)   o_ref: (Bblk, lens, L)
    w = w_ref[...]
    bblk = x_ref.shape[0]

    def body(i, carry):
        # (lens, C) @ (C, L) -> (lens, L) on the MXU, f32 accumulation.
        y = lax.dot_general(
            w, x_ref[i],
            (((1,), (0,)), ((), ())),
            preferred_element_type=jnp.float32,
        )
        o_ref[i] = jnp.sin(y).astype(o_ref.dtype)   # SinActivation, fused
        return carry

    # fori_loop keeps live ranges bounded (no vreg blow-up at large block_b);
    # a small unroll still gives the LLO scheduler room to overlap iterations.
    lax.fori_loop(0, bblk, body, 0, unroll=min(8, bblk))


def lff_forward(x, w, *, block_b=None, out_dtype=None):
    """LFF forward: Conv1d(channel -> lens, kernel_size=1, bias=False) + sin.

    x: (B, channel, L)
    w: (lens, channel)   (Conv1d weight squeezed over the k=1 axis)
    returns (B, lens, L) in `out_dtype` (default: x.dtype)
    """
    B, C, L = x.shape
    lens, Cw = w.shape
    assert Cw == C, (Cw, C)
    out_dtype = jnp.dtype(out_dtype) if out_dtype is not None else x.dtype

    if block_b is None:
        # Target ~1 MiB of output per grid step (good HBM efficiency, tiny
        # VMEM footprint even double-buffered), but keep >= ~8 grid steps
        # when B allows so both TensorCores (v7x) pipeline DMA vs compute.
        out_row_bytes = lens * L * out_dtype.itemsize
        block_b = max(1, (1 << 20) // max(1, out_row_bytes))
        block_b = min(block_b, max(1, pl.cdiv(B, 8)))
    block_b = max(1, min(block_b, B))

    # Ragged B: pad to a multiple of block_b (padded rows are zeros -> sin(0)=0,
    # discarded below).  Avoids the single-giant-step fallback.
    grid_len = pl.cdiv(B, block_b)
    B_pad = grid_len * block_b
    if B_pad != B:
        x = jnp.pad(x, ((0, B_pad - B), (0, 0), (0, 0)))

    cost = pl.CostEstimate(
        flops=int(2 * B_pad * lens * C * L),
        transcendentals=int(B_pad * lens * L),
        bytes_accessed=int(x.dtype.itemsize * B_pad * C * L
                           + out_dtype.itemsize * B_pad * lens * L
                           + w.dtype.itemsize * lens * C),
    )

    out = pl.pallas_call(
        _lff_kernel,
        out_shape=jax.ShapeDtypeStruct((B_pad, lens, L), out_dtype),
        grid_spec=pltpu.PrefetchScalarGridSpec(
            num_scalar_prefetch=0,
            grid=(grid_len,),
            in_specs=[
                pl.BlockSpec((block_b, C, L), lambda i: (i, 0, 0)),
                pl.BlockSpec((lens, C), lambda i: (0, 0)),  # constant block -> fetched once
            ],
            out_specs=pl.BlockSpec((block_b, lens, L), lambda i: (i, 0, 0)),
        ),
        compiler_params=pltpu.CompilerParams(
            dimension_semantics=("parallel",)),
        cost_estimate=cost,
    )(x, w)

    if B_pad != B:
        out = out[:B]
    return out


if __name__ == "__main__":
    # Small shapes consistent with the module's Conv1d NCL convention.
    channel, lens, L, B = 8, 64, 128, 8

    key = jax.random.PRNGKey(0)
    kx, kw = jax.random.split(key)
    x = jax.random.normal(kx, (B, channel, L), dtype=jnp.float32)

    # nn.init.uniform_(conv.weight, -sqrt(9/channel), sqrt(9/channel))
    bound = math.sqrt(9.0 / channel)
    w = jax.random.uniform(kw, (lens, channel), dtype=jnp.float32,
                           minval=-bound, maxval=bound)

    fwd = jax.jit(functools.partial(lff_forward))
    out = jax.block_until_ready(fwd(x, w))
    assert out.shape == (B, lens, L), out.shape

    ref = jnp.sin(jnp.einsum('oc,bcl->bol', w, x))
    assert bool(jnp.all(jnp.isfinite(out)))
    assert jnp.allclose(out, ref, atol=2e-5, rtol=2e-5)

    # Also exercise a ragged batch (pads internally, slices the result).
    xr = x[:5]
    outr = jax.block_until_ready(lff_forward(xr, w))
    assert jnp.allclose(outr, ref[:5], atol=2e-5, rtol=2e-5)

    print("KERNEL_OK")
</pallas_src>

<mosaic_0001>
module attributes {stable_mosaic.version = 11 : i64} {
  func.func @_lff_kernel(%arg0: i32, %arg1: memref<1x8x128xf32, #tpu.memory_space<vmem>>, %arg2: memref<64x8xf32, #tpu.memory_space<vmem>>, %arg3: memref<1x64x128xf32, #tpu.memory_space<vmem>>) attributes {dimension_semantics = [#tpu.dimension_semantics<parallel>], iteration_bounds = array<i64: 8>, scalar_prefetch = 0 : i64, scratch_operands = 0 : i64, tpu.core_type = #tpu.core_type<tc>, window_params = [{transform_indices = @transform_0, window_bounds = array<i64: 1, 8, 128>}, {pipeline_mode = #tpu.pipeline_mode<synchronous>, transform_indices = @transform_1, window_bounds = array<i64: 64, 8>}, {transform_indices = @transform_2, window_bounds = array<i64: 1, 64, 128>}]} {
    %c0 = arith.constant 0 : index
    %c0_0 = arith.constant 0 : index
    %0 = vector.load %arg2[%c0, %c0_0] : memref<64x8xf32, #tpu.memory_space<vmem>>, vector<64x8xf32>
    %c0_i32 = arith.constant 0 : i32
    %1 = arith.index_cast %c0_i32 : i32 to index
    %c0_1 = arith.constant 0 : index
    %c0_2 = arith.constant 0 : index
    %2 = vector.load %arg1[%1, %c0_1, %c0_2] : memref<1x8x128xf32, #tpu.memory_space<vmem>>, vector<1x8x128xf32>
    %3 = vector.shape_cast %2 : vector<1x8x128xf32> to vector<8x128xf32>
    %cst = arith.constant dense<0.000000e+00> : vector<64x128xf32>
    %4 = tpu.matmul %0, %3, %cst {dimension_numbers = #tpu.dot_dimension_numbers<[1], [0], [0], [1], [0, 0, 1, 1], [], []>} : vector<64x8xf32>, vector<8x128xf32>, vector<64x128xf32> -> vector<64x128xf32>
    %5 = math.sin %4 : vector<64x128xf32>
    %6 = arith.index_cast %c0_i32 : i32 to index
    %c0_3 = arith.constant 0 : index
    %c0_4 = arith.constant 0 : index
    %7 = vector.load %arg3[%6, %c0_3, %c0_4] : memref<1x64x128xf32, #tpu.memory_space<vmem>>, vector<1x64x128xf32>
    %8 = vector.shape_cast %7 : vector<1x64x128xf32> to vector<64x128xf32>
    %9 = vector.shape_cast %5 : vector<64x128xf32> to vector<1x64x128xf32>
    tpu.vector_store %arg3[%6, %c0_3, %c0_4], %9 {strides = array<i32>} : memref<1x64x128xf32, #tpu.memory_space<vmem>>, vector<1x64x128xf32>,
    %c1_i32 = arith.constant 1 : i32
    return
  }
  func.func @transform_0(%arg0: i32) -> (i32, i32, i32) {
    %c0_i32 = arith.constant 0 : i32
    %c0_i32_0 = arith.constant 0 : i32
    %c0_i32_1 = arith.constant 0 : i32
    return %arg0, %c0_i32, %c0_i32_0 : i32, i32, i32
  }
  func.func @transform_1(%arg0: i32) -> (i32, i32) {
    %c0_i32 = arith.constant 0 : i32
    %c0_i32_0 = arith.constant 0 : i32
    %c0_i32_1 = arith.constant 0 : i32
    return %c0_i32, %c0_i32_0 : i32, i32
  }
  func.func @transform_2(%arg0: i32) -> (i32, i32, i32) {
    %c0_i32 = arith.constant 0 : i32
    %c0_i32_0 = arith.constant 0 : i32
    %c0_i32_1 = arith.constant 0 : i32
    return %arg0, %c0_i32, %c0_i32_0 : i32, i32, i32
  }
}

</mosaic_0001>

<llo_original>
// kernel: lff_forward.1
$region0: #{lff_forward.1}
  #allocation0 [shape = 'u32[]', space=smem, size = 0x4, offset = 0x4, fixed_abs, tag = 'smem constant byte address 0x4 - core index']
  #allocation1 [shape = 'u32[144,128]{1,0:T(1,128)}', space=vmem, size = 0x12000, scoped, tag = 'internal scratch']
  %s0 = inlined_call_operand.vmem [shape: f32[8,8,128], index: 0, kind: input, shape index: {}]
  %s1 = inlined_call_operand.vmem [shape: f32[64,8], index: 1, kind: input, shape index: {}]
  %s2 = inlined_call_operand.hbm [shape: f32[8,64,128], index: 2, kind: output, shape index: {}]
  %s3 = sld [smem:[#allocation0]]
  $region41: #{lff_forward.1} parent=0
    _
  %s5 = ssub.s32 1, %s3
  %s6 = scalar_select 0, %s5, %s3
  $region1: #{lff_forward.1} parent=0
    #allocation2 [shape = 'u8[65536]{0}', space=vmem, size = 0x10000, scoped, tag = 'output window, operand 0']
    #allocation3 [shape = 's32[2]{0}', space=sflag, size = 0x8, scoped, tag = 'scoped memory for lff_forward.1']
    %7 = vsyncpa [#allocation3], 0
    %s8 = scalar_lea.sflag [#allocation3], 1
    %9 = vsyncpa %s8, 0
    loop: start=0, step=1, limit=10
    $region2: #{lff_forward.1} parent=1 // loop_pre_header
      _
    $region3: #{lff_forward.1} parent=1 // loop_header
      %s11 = sphi 0, %s15
      %p12 = scmp.ge.s32.totalorder %s11, 10
      %s21 = sphi 0, %s23
      %s24 = sphi 0, %s21
      %s25 = sphi 0, %s24
      %s41 = sphi 0, %s25
      %s45 = sphi 0, %s45
      %s47 = sphi 0, %s45
      %s48 = sphi 0, %s47
      %s62 = sphi 0, %s48
      %s68 = sphi 0, %s70
      %s71 = sphi 0, %s68
      %s72 = sphi 0, %s71
      %s88 = sphi 0, %s72
    $region4: #{lff_forward.1} parent=1 // loop_header_branch
      %14 = sbr.rel (%p12) target = $region8
    $region5: #{lff_forward.1} parent=1 // loop_body
      %s16 = ssub.s32 %s11, 1
      %s17 = ssub.s32 %s11, 2
      %s18 = sadd.s32 %s11, 1
      %s19 = ssub.s32 %s11, %s18
      %p20 = scmp.eq.s32.totalorder %s19, 0
      %s22 = sadd.s32 %s21, 1
      %s23 = scalar_select %p20, %s21, %s22
      %p26 = pneg %p20
      %p27 = scmp.eq.s32.totalorder %s11, 7
      %p28 = por %p26, %p27
      %p29 = scmp.ne.s32.totalorder %s21, %s24
      %p30 = scmp.eq.s32.totalorder %s11, 0
      %p31 = por %p29, %p30
      %p32 = scmp.ne.s32.totalorder %s21, %s24
      %p33 = scmp.eq.s32.totalorder %s16, 7
      %p34 = por %p32, %p33
      %p35 = scmp.ne.s32.totalorder %s24, %s25
      %p36 = scmp.eq.s32.totalorder %s16, 0
      %p37 = por %p35, %p36
      %p38 = scmp.ne.s32.totalorder %s24, %s25
      %p39 = scmp.eq.s32.totalorder %s17, 7
      %p40 = por %p38, %p39
      %p42 = scmp.ne.s32.totalorder %s25, %s41
      %p43 = scmp.eq.s32.totalorder %s17, 0
      %p44 = por %p42, %p43
      %s46 = sadd.s32 %s45, 1
      %p49 = scmp.eq.s32.totalorder %s11, 7
      %p50 = scmp.ne.s32.totalorder %s45, %s47
      %p51 = scmp.eq.s32.totalorder %s11, 0
      %p52 = por %p50, %p51
      %p53 = scmp.ne.s32.totalorder %s45, %s47
      %p54 = scmp.eq.s32.totalorder %s16, 7
      %p55 = por %p53, %p54
      %p56 = scmp.ne.s32.totalorder %s47, %s48
      %p57 = scmp.eq.s32.totalorder %s16, 0
      %p58 = por %p56, %p57
      %p59 = scmp.ne.s32.totalorder %s47, %s48
      %p60 = scmp.eq.s32.totalorder %s17, 7
      %p61 = por %p59, %p60
      %p63 = scmp.ne.s32.totalorder %s48, %s62
      %p64 = scmp.eq.s32.totalorder %s17, 0
      %p65 = por %p63, %p64
      %s66 = ssub.s32 %s11, %s18
      %p67 = scmp.eq.s32.totalorder %s66, 0
      %s69 = sadd.s32 %s68, 1
      %s70 = scalar_select %p67, %s68, %s69
      %p73 = pneg %p67
      %p74 = scmp.eq.s32.totalorder %s11, 7
      %p75 = por %p73, %p74
      %p76 = scmp.ne.s32.totalorder %s68, %s71
      %p77 = scmp.eq.s32.totalorder %s11, 0
      %p78 = por %p76, %p77
      %p79 = scmp.ne.s32.totalorder %s68, %s71
      %p80 = scmp.eq.s32.totalorder %s16, 7
      %p81 = por %p79, %p80
      %p82 = scmp.ne.s32.totalorder %s71, %s72
      %p83 = scmp.eq.s32.totalorder %s16, 0
      %p84 = por %p82, %p83
      %p85 = scmp.ne.s32.totalorder %s71, %s72
      %p86 = scmp.eq.s32.totalorder %s17, 7
      %p87 = por %p85, %p86
      %p89 = scmp.ne.s32.totalorder %s72, %s88
      %p90 = scmp.eq.s32.totalorder %s17, 0
      %p91 = por %p89, %p90
      %p92 = scmp.le.s32.totalorder 1, %s11
      %p93 = scmp.lt.s32.totalorder %s11, 9
      %p94 = pnand %p92, %p93
      %p95 = pneg %p94
      // Predicated region
      $region9: #{lff_forward.1} parent=5 // pred_check
        _
      $region10: #{lff_forward.1} parent=5 // pred_check_branch
        %97 = sbr.rel (%p94) target = $region12
      $region11: #{lff_forward.1} parent=5 // pred_region
        %s98 = ssub.s32 %s11, 1
        // Predicated region
        $region13: #{lff_forward.1} parent=11 // pred_check
          %p99 = pneg %p58
        $region14: #{lff_forward.1} parent=11 // pred_check_branch
          %101 = sbr.rel (%p99) target = $region16
        $region15: #{lff_forward.1} parent=11 // pred_region
          _
        $region16: #{lff_forward.1} parent=11 // pred_fallthru
          _
      $region12: #{lff_forward.1} parent=5 // pred_fallthru
        _
      %p102 = scmp.lt.s32.totalorder %s11, 8
      // Predicated region
      $region17: #{lff_forward.1} parent=5 // pred_check
        %p103 = pneg %p102
      $region18: #{lff_forward.1} parent=5 // pred_check_branch
        %105 = sbr.rel (%p103) target = $region20
      $region19: #{lff_forward.1} parent=5 // pred_region
        // Predicated region
        $region21: #{lff_forward.1} parent=19 // pred_check
          %p106 = pneg %p31
        $region22: #{lff_forward.1} parent=19 // pred_check_branch
          %108 = sbr.rel (%p106) target = $region24
        $region23: #{lff_forward.1} parent=19 // pred_region
          %p109 = scmp.lt.s32.totalorder %s11, 7
          %s110 = scalar_select %p109, %s11, 7
          %s111 = smul.addr %s110, 8
          %s112 = scalar_lea.vmem %s0, %s111
        $region24: #{lff_forward.1} parent=19 // pred_fallthru
          _
      $region20: #{lff_forward.1} parent=5 // pred_fallthru
        _
      %p113 = scmp.le.s32.totalorder 1, %s11
      %p114 = scmp.lt.s32.totalorder %s11, 9
      %p115 = pnand %p113, %p114
      %p116 = pneg %p115
      // Predicated region
      $region25: #{lff_forward.1} parent=5 // pred_check
        _
      $region26: #{lff_forward.1} parent=5 // pred_check_branch
        %118 = sbr.rel (%p115) target = $region28
      $region27: #{lff_forward.1} parent=5 // pred_region
        %s119 = ssub.s32 %s11, 1
        %p120 = scmp.lt.s32.totalorder %s16, 7
        %s121 = scalar_select %p120, %s16, 7
        %s122 = smul.addr %s121, 8
        %s123 = scalar_lea.vmem %s0, %s122
        %p124 = pneg %p37
        %p125 = pneg %p34
        %p126 = pneg %p58
        %p127 = pneg %p55
        %p128 = pneg %p84
        %p129 = pneg %p81
        %s130 = sand.u32 %s71, 1
        %s131 = scalar_lea.sflag [#allocation3], %s130
        %s132 = sand.u32 %s71, 1
        %s133 = smul.addr %s132, 64
        %s134 = scalar_lea.vmem [#allocation2], %s133
        %p135 = scmp.lt.s32.totalorder %s16, 7
        %s136 = scalar_select %p135, %s16, 7
        %s137 = smul.addr %s136, 8
        %s138 = scalar_lea.vmem %s0, %s137
        %v139 = vld [vmem:[%s1] sm:$0xff]
        %v140 = vld [vmem:[%s1 + $0x8] sm:$0xff]
        %v141 = vld [vmem:[%s1 + $0x10] sm:$0xff]
        %v142 = vld [vmem:[%s1 + $0x18] sm:$0xff]
        %v143 = vld [vmem:[%s1 + $0x20] sm:$0xff]
        %v144 = vld [vmem:[%s1 + $0x28] sm:$0xff]
        %v145 = vld [vmem:[%s1 + $0x30] sm:$0xff]
        %v146 = vld [vmem:[%s1 + $0x38] sm:$0xff]
        %v147 = vld [vmem:[%s138] sm:$0xff]
        %vm148 = vcmask 64512
        %v150 = vsel %vm148, %v139, 0
        %v153 = vsel %vm148, %v140, 0
        %v156 = vsel %vm148, %v141, 0
        %v159 = vsel %vm148, %v142, 0
        %v162 = vsel %vm148, %v143, 0
        %v165 = vsel %vm148, %v144, 0
        %v168 = vsel %vm148, %v145, 0
        %v171 = vsel %vm148, %v146, 0
        %173 = vmatprep.subr.mxu0 0.0
        %174 = vmatpush1.msra.mxu0 0.0
        %175 = vmatprep.subr.mxu0 0.0
        %176 = vmatpush1.msra.mxu0 0.0
        %177 = vmatprep.subr.mxu0 0.0
        %178 = vmatpush1.msra.mxu0 0.0
        %179 = vmatprep.subr.mxu0 0.0
        %180 = vmatpush1.msra.mxu0 0.0
        %181 = vmatprep.subr.mxu0 0.0
        %182 = vmatpush1.msra.mxu0 0.0
        %183 = vmatprep.subr.mxu0 0.0
        %184 = vmatpush1.msra.mxu0 0.0
        %185 = vmatprep.subr.mxu0 0.0
        %186 = vmatpush1.msra.mxu0 0.0
        %187 = vmatprep.subr.mxu0 0.0
        %188 = vmatpush1.msra.mxu0 0.0
        %189 = vmatprep.subr.mxu0 0.0
        %190 = vmatpush1.msra.mxu0 0.0
        %191 = vmatprep.subr.mxu0 0.0
        %192 = vmatpush1.msra.mxu0 0.0
        %193 = vmatprep.subr.mxu0 0.0
        %194 = vmatpush1.msra.mxu0 0.0
        %195 = vmatprep.subr.mxu0 0.0
        %196 = vmatpush1.msra.mxu0 0.0
        %197 = vmatprep.subr.mxu0 0.0
        %198 = vmatpush1.msra.mxu0 0.0
        %199 = vmatprep.subr.mxu0 0.0
        %200 = vmatpush1.msra.mxu0 0.0
        %201 = vmatprep.subr.mxu0 0.0
        %202 = vmatpush1.msra.mxu0 0.0
        %203 = vmatprep.subr.mxu0 0.0
        %204 = vmatpush1.msra.mxu0 %v147
        %205 = vmatprep.subr.mxu0 0.0
        %206 = vmatpush2.msra.mxu0 0.0
        %207 = vmatprep.subr.mxu0 0.0
        %208 = vmatpush2.msra.mxu0 0.0
        %209 = vmatprep.subr.mxu0 0.0
        %210 = vmatpush2.msra.mxu0 0.0
        %211 = vmatprep.subr.mxu0 0.0
        %212 = vmatpush2.msra.mxu0 0.0
        %213 = vmatprep.subr.mxu0 0.0
        %214 = vmatpush2.msra.mxu0 0.0
        %215 = vmatprep.subr.mxu0 0.0
        %216 = vmatpush2.msra.mxu0 0.0
        %217 = vmatprep.subr.mxu0 0.0
        %218 = vmatpush2.msra.mxu0 0.0
        %219 = vmatprep.subr.mxu0 0.0
        %220 = vmatpush2.msra.mxu0 0.0
        %221 = vmatprep.subr.mxu0 0.0
        %222 = vmatpush2.msra.mxu0 0.0
        %223 = vmatprep.subr.mxu0 0.0
        %224 = vmatpush2.msra.mxu0 0.0
        %225 = vmatprep.subr.mxu0 0.0
        %226 = vmatpush2.msra.mxu0 0.0
        %227 = vmatprep.subr.mxu0 0.0
        %228 = vmatpush2.msra.mxu0 0.0
        %229 = vmatprep.subr.mxu0 0.0
        %230 = vmatpush2.msra.mxu0 0.0
        %231 = vmatprep.subr.mxu0 0.0
        %232 = vmatpush2.msra.mxu0 0.0
        %233 = vmatprep.subr.mxu0 0.0
        %234 = vmatpush2.msra.mxu0 0.0
        %235 = vmatprep.subr.mxu0 0.0
        %236 = vmatpush2.msra.mxu0 0.0
        %237 = vmatprep.mubr.f32.mxu0 0.0
        %238 = vmatmul.mubr.f32.gmra.mxu0 %v150
        %v239 = vpop.f32.mrf.mxu0
        %v240 = vadd.f32 0.0, %v239
        %v241 = vpop.f32.mrf.mxu0
        %242 = vmatprep.mubr.f32.mxu0 0.0
        %243 = vmatmul.mubr.f32.gmra.mxu0 %v153
        %v244 = vpop.f32.mrf.mxu0
        %v245 = vadd.f32 0.0, %v244
        %v246 = vpop.f32.mrf.mxu0
        %247 = vmatprep.mubr.f32.mxu0 0.0
        %248 = vmatmul.mubr.f32.gmra.mxu0 %v156
        %v249 = vpop.f32.mrf.mxu0
        %v250 = vadd.f32 0.0, %v249
        %v251 = vpop.f32.mrf.mxu0
        %252 = vmatprep.mubr.f32.mxu0 0.0
        %253 = vmatmul.mubr.f32.gmra.mxu0 %v159
        %v254 = vpop.f32.mrf.mxu0
        %v255 = vadd.f32 0.0, %v254
        %v256 = vpop.f32.mrf.mxu0
        %257 = vmatprep.mubr.f32.mxu0 0.0
        %258 = vmatmul.mubr.f32.gmra.mxu0 %v162
        %v259 = vpop.f32.mrf.mxu0
        %v260 = vadd.f32 0.0, %v259
        %v261 = vpop.f32.mrf.mxu0
        %262 = vmatprep.mubr.f32.mxu0 0.0
        %263 = vmatmul.mubr.f32.gmra.mxu0 %v165
        %v264 = vpop.f32.mrf.mxu0
        %v265 = vadd.f32 0.0, %v264
        %v266 = vpop.f32.mrf.mxu0
        %267 = vmatprep.mubr.f32.mxu0 0.0
        %268 = vmatmul.mubr.f32.gmra.mxu0 %v168
        %v269 = vpop.f32.mrf.mxu0
        %v270 = vadd.f32 0.0, %v269
        %v271 = vpop.f32.mrf.mxu0
        %272 = vmatprep.mubr.f32.mxu0 0.0
        %273 = vmatmul.mubr.f32.gmra.mxu0 %v171
        %v274 = vpop.f32.mrf.mxu0
        %v275 = vadd.f32 0.0, %v274
        %v276 = vpop.f32.mrf.mxu0
        %277 = vdwg.mxu0
        %v278 = vand.u32 2147483647, %v240
        %vm279 = vcmp.le.f32.partialorder %v278, 0.7853982
        %vm280 = vcmp.lt.s32.totalorder %v240, 0
        %v281 = vand.u32 %v240, 2139095040
        %v282 = vshrl.u32 %v281, 23
        %v283 = vsub.s32 %v282, 127
        %v284 = vand.u32 2147483647, %v240
        %v285 = vand.u32 %v284, 8388607
        %v286 = vor.u32 %v285, 8388608
        %v287 = vsub.s32 0, %v286
        %v288 = vadd.s32 %v283, 1
        %vm289 = vcmp.gt.s32.totalorder %v288, 0
        %v290 = vsel %vm289, %v288, 0
        %v291 = vshrl.u32 %v290, 5
        %v292 = vand.u32 %v290, 31
        %v293 = vsub.s32 32, %v292
        %v294 = vshrl.u32 683565275, %v293
        %v295 = vshll.u32 683565275, %v292
        %v296 = vshrl.u32 2475754826, %v293
        %v297 = vor.u32 %v295, %v296
        %v298 = vshll.u32 2475754826, %v292
        %v299 = vshrl.u32 2131351028, %v293
        %v300 = vor.u32 %v298, %v299
        %v301 = vshll.u32 2131351028, %v292
        %v302 = vshrl.u32 2102212464, %v293
        %v303 = vor.u32 %v301, %v302
        %v304 = vshll.u32 2102212464, %v292
        %v305 = vshrl.u32 920167782, %v293
        %v306 = vor.u32 %v304, %v305
        %v307 = vshll.u32 920167782, %v292
        %v308 = vshrl.u32 1326507024, %v293
        %v309 = vor.u32 %v307, %v308
        %vm310 = vcmp.lt.s32.totalorder %v291, 1
        %vm311 = vcmp.lt.s32.totalorder %v291, 2
        %vm312 = vcmp.lt.s32.totalorder %v291, 3
        %vm313 = vcmp.lt.s32.totalorder %v291, 4
        %v314 = vsel %vm310, %v294, %v297
        %v315 = vsel %vm313, %v303, 2102212464
        %v316 = vsel %vm312, %v300, %v315
        %v317 = vsel %vm311, %v314, %v316
        %v318 = vsel %vm310, %v297, %v300
        %v319 = vsel %vm313, %v306, 920167782
        %v320 = vsel %vm312, %v303, %v319
        %v321 = vsel %vm311, %v318, %v320
        %v322 = vsel %vm310, %v300, %v303
        %v323 = vsel %vm313, %v309, 1326507024
        %v324 = vsel %vm312, %v306, %v323
        %v325 = vsel %vm311, %v322, %v324
        %v326 = vshll.u32 %v286, 8
        %v327 = vmul.u32.u64.compose %v326, %v325
        %v328 = vextract.low.u32 %v327
        %v329 = vextract.high.u32 %v327
        %v330 = vmul.u32.u64.compose %v326, %v321
        %v331 = vextract.low.u32 %v330
        %v332 = vextract.high.u32 %v330
        %v333 = vmul.u32 %v326, %v317
        %v334 = vadd.s32 %v329, %v331
        %vm335 = vc.u32 %v329, %v331
        %v336 = vadd.s32 %v332, 1
        %v337 = vsel %vm335, %v336, %v332
        %v338 = vadd.s32 %v333, %v337
        %v339 = vadd.s32 %v338, 536870912
        %v340 = vshrl.u32 %v339, 30
        %v341 = vshll.u32 %v340, 30
        %v342 = vsub.s32 %v338, %v341
        %vm343 = vcmp.lt.s32.totalorder %v342, 0
        %v344 = vsub.s32 0, %v342
        %v345 = vsel %vm343, %v344, %v342
        %v346 = vclz %v345
        %v347 = vsub.s32 %v346, 2
        %vm348 = vcmp.gt.s32.totalorder 0, %v347
        %v349 = vsel %vm348, 0, %v347
        %v350 = vsub.s32 32, %v349
        %v351 = vshll.u32 %v342, %v349
        %v352 = vshrl.u32 %v334, %v350
        %v353 = vor.u32 %v351, %v352
        %v354 = vsub.s32 4294967266, %v349
        %v355 = vadd.s32 %v354, 127
        %v356 = vshll.u32 %v355, 23
        %v357 = vor.u32 4788187, %v356
        %v358 = vand.u32 2147483647, %v357
        %v360 = vcvt.s32.f32 %v353
        %v361 = vmul.f32 %v360, %v358
        %v362 = vxor.u32 %v361, 2147483648
        %v363 = vsel %vm280, %v362, %v361
        %v364 = vsub.s32 4, %v340
        %v365 = vsel %vm280, %v364, %v340
        %v366 = vsel %vm279, %v240, %v363
        %v367 = vsel %vm279, 0, %v365
        %v368 = vcosq.f32.pop %v366
        %v369 = vsinq.f32.pop %v366
        %vm370 = vweird.f32 %v240
        %v371 = vadd.s32 %v367, 3
        %v372 = vand.u32 %v371, 3
        %vm373 = vcmp.lt.s32.totalorder %v372, 2
        %vm374 = vcmp.eq.s32.totalorder %v372, 0
        %v375 = vxor.u32 %v369, 2147483648
        %v376 = vsel %vm374, %v368, %v375
        %vm377 = vcmp.eq.s32.totalorder %v372, 2
        %v378 = vxor.u32 %v368, 2147483648
        %v379 = vsel %vm377, %v378, %v369
        %v380 = vsel %vm373, %v376, %v379
        %v381 = vsel %vm370, nan, %v380
        %v382 = vand.u32 2147483647, %v245
        %vm383 = vcmp.le.f32.partialorder %v382, 0.7853982
        %vm384 = vcmp.lt.s32.totalorder %v245, 0
        %v385 = vand.u32 %v245, 2139095040
        %v386 = vshrl.u32 %v385, 23
        %v387 = vsub.s32 %v386, 127
        %v388 = vand.u32 2147483647, %v245
        %v389 = vand.u32 %v388, 8388607
        %v390 = vor.u32 %v389, 8388608
        %v391 = vsub.s32 0, %v390
        %v392 = vadd.s32 %v387, 1
        %vm393 = vcmp.gt.s32.totalorder %v392, 0
        %v394 = vsel %vm393, %v392, 0
        %v395 = vshrl.u32 %v394, 5
        %v396 = vand.u32 %v394, 31
        %v397 = vsub.s32 32, %v396
        %v398 = vshrl.u32 683565275, %v397
        %v399 = vshll.u32 683565275, %v396
        %v400 = vshrl.u32 2475754826, %v397
        %v401 = vor.u32 %v399, %v400
        %v402 = vshll.u32 2475754826, %v396
        %v403 = vshrl.u32 2131351028, %v397
        %v404 = vor.u32 %v402, %v403
        %v405 = vshll.u32 2131351028, %v396
        %v406 = vshrl.u32 2102212464, %v397
        %v407 = vor.u32 %v405, %v406
        %v408 = vshll.u32 2102212464, %v396
        %v409 = vshrl.u32 920167782, %v397
        %v410 = vor.u32 %v408, %v409
        %v411 = vshll.u32 920167782, %v396
        %v412 = vshrl.u32 1326507024, %v397
        %v413 = vor.u32 %v411, %v412
        %vm414 = vcmp.lt.s32.totalorder %v395, 1
        %vm415 = vcmp.lt.s32.totalorder %v395, 2
        %vm416 = vcmp.lt.s32.totalorder %v395, 3
        %vm417 = vcmp.lt.s32.totalorder %v395, 4
        %v418 = vsel %vm414, %v398, %v401
        %v419 = vsel %vm417, %v407, 2102212464
        %v420 = vsel %vm416, %v404, %v419
        %v421 = vsel %vm415, %v418, %v420
        %v422 = vsel %vm414, %v401, %v404
        %v423 = vsel %vm417, %v410, 920167782
        %v424 = vsel %vm416, %v407, %v423
        %v425 = vsel %vm415, %v422, %v424
        %v426 = vsel %vm414, %v404, %v407
        %v427 = vsel %vm417, %v413, 1326507024
        %v428 = vsel %vm416, %v410, %v427
        %v429 = vsel %vm415, %v426, %v428
        %v430 = vshll.u32 %v390, 8
        %v431 = vmul.u32.u64.compose %v430, %v429
        %v432 = vextract.low.u32 %v431
        %v433 = vextract.high.u32 %v431
        %v434 = vmul.u32.u64.compose %v430, %v425
        %v435 = vextract.low.u32 %v434
        %v436 = vextract.high.u32 %v434
        %v437 = vmul.u32 %v430, %v421
        %v438 = vadd.s32 %v433, %v435
        %vm439 = vc.u32 %v433, %v435
        %v440 = vadd.s32 %v436, 1
        %v441 = vsel %vm439, %v440, %v436
        %v442 = vadd.s32 %v437, %v441
        %v443 = vadd.s32 %v442, 536870912
        %v444 = vshrl.u32 %v443, 30
        %v445 = vshll.u32 %v444, 30
        %v446 = vsub.s32 %v442, %v445
        %vm447 = vcmp.lt.s32.totalorder %v446, 0
        %v448 = vsub.s32 0, %v446
        %v449 = vsel %vm447, %v448, %v446
        %v450 = vclz %v449
        %v451 = vsub.s32 %v450, 2
        %vm452 = vcmp.gt.s32.totalorder 0, %v451
        %v453 = vsel %vm452, 0, %v451
        %v454 = vsub.s32 32, %v453
        %v455 = vshll.u32 %v446, %v453
        %v456 = vshrl.u32 %v438, %v454
        %v457 = vor.u32 %v455, %v456
        %v458 = vsub.s32 4294967266, %v453
        %v459 = vadd.s32 %v458, 127
        %v460 = vshll.u32 %v459, 23
        %v461 = vor.u32 4788187, %v460
        %v462 = vand.u32 2147483647, %v461
        %v464 = vcvt.s32.f32 %v457
        %v465 = vmul.f32 %v464, %v462
        %v466 = vxor.u32 %v465, 2147483648
        %v467 = vsel %vm384, %v466, %v465
        %v468 = vsub.s32 4, %v444
        %v469 = vsel %vm384, %v468, %v444
        %v470 = vsel %vm383, %v245, %v467
        %v471 = vsel %vm383, 0, %v469
        %v472 = vcosq.f32.pop %v470
        %v473 = vsinq.f32.pop %v470
        %vm474 = vweird.f32 %v245
        %v475 = vadd.s32 %v471, 3
        %v476 = vand.u32 %v475, 3
        %vm477 = vcmp.lt.s32.totalorder %v476, 2
        %vm478 = vcmp.eq.s32.totalorder %v476, 0
        %v479 = vxor.u32 %v473, 2147483648
        %v480 = vsel %vm478, %v472, %v479
        %vm481 = vcmp.eq.s32.totalorder %v476, 2
        %v482 = vxor.u32 %v472, 2147483648
        %v483 = vsel %vm481, %v482, %v473
        %v484 = vsel %vm477, %v480, %v483
        %v485 = vsel %vm474, nan, %v484
        %v486 = vand.u32 2147483647, %v250
        %vm487 = vcmp.le.f32.partialorder %v486, 0.7853982
        %vm488 = vcmp.lt.s32.totalorder %v250, 0
        %v489 = vand.u32 %v250, 2139095040
        %v490 = vshrl.u32 %v489, 23
        %v491 = vsub.s32 %v490, 127
        %v492 = vand.u32 2147483647, %v250
        %v493 = vand.u32 %v492, 8388607
        %v494 = vor.u32 %v493, 8388608
        %v495 = vsub.s32 0, %v494
        %v496 = vadd.s32 %v491, 1
        %vm497 = vcmp.gt.s32.totalorder %v496, 0
        %v498 = vsel %vm497, %v496, 0
        %v499 = vshrl.u32 %v498, 5
        %v500 = vand.u32 %v498, 31
        %v501 = vsub.s32 32, %v500
        %v502 = vshrl.u32 683565275, %v501
        %v503 = vshll.u32 683565275, %v500
        %v504 = vshrl.u32 2475754826, %v501
        %v505 = vor.u32 %v503, %v504
        %v506 = vshll.u32 2475754826, %v500
        %v507 = vshrl.u32 2131351028, %v501
        %v508 = vor.u32 %v506, %v507
        %v509 = vshll.u32 2131351028, %v500
        %v510 = vshrl.u32 2102212464, %v501
        %v511 = vor.u32 %v509, %v510
        %v512 = vshll.u32 2102212464, %v500
        %v513 = vshrl.u32 920167782, %v501
        %v514 = vor.u32 %v512, %v513
        %v515 = vshll.u32 920167782, %v500
        %v516 = vshrl.u32 1326507024, %v501
        %v517 = vor.u32 %v515, %v516
        %vm518 = vcmp.lt.s32.totalorder %v499, 1
        %vm519 = vcmp.lt.s32.totalorder %v499, 2
        %vm520 = vcmp.lt.s32.totalorder %v499, 3
        %vm521 = vcmp.lt.s32.totalorder %v499, 4
        %v522 = vsel %vm518, %v502, %v505
        %v523 = vsel %vm521, %v511, 2102212464
        %v524 = vsel %vm520, %v508, %v523
        %v525 = vsel %vm519, %v522, %v524
        %v526 = vsel %vm518, %v505, %v508
        %v527 = vsel %vm521, %v514, 920167782
        %v528 = vsel %vm520, %v511, %v527
        %v529 = vsel %vm519, %v526, %v528
        %v530 = vsel %vm518, %v508, %v511
        %v531 = vsel %vm521, %v517, 1326507024
        %v532 = vsel %vm520, %v514, %v531
        %v533 = vsel %vm519, %v530, %v532
        %v534 = vshll.u32 %v494, 8
        %v535 = vmul.u32.u64.compose %v534, %v533
        %v536 = vextract.low.u32 %v535
        %v537 = vextract.high.u32 %v535
        %v538 = vmul.u32.u64.compose %v534, %v529
        %v539 = vextract.low.u32 %v538
        %v540 = vextract.high.u32 %v538
        %v541 = vmul.u32 %v534, %v525
        %v542 = vadd.s32 %v537, %v539
        %vm543 = vc.u32 %v537, %v539
        %v544 = vadd.s32 %v540, 1
        %v545 = vsel %vm543, %v544, %v540
        %v546 = vadd.s32 %v541, %v545
        %v547 = vadd.s32 %v546, 536870912
        %v548 = vshrl.u32 %v547, 30
        %v549 = vshll.u32 %v548, 30
        %v550 = vsub.s32 %v546, %v549
        %vm551 = vcmp.lt.s32.totalorder %v550, 0
        %v552 = vsub.s32 0, %v550
        %v553 = vsel %vm551, %v552, %v550
        %v554 = vclz %v553
        %v555 = vsub.s32 %v554, 2
        %vm556 = vcmp.gt.s32.totalorder 0, %v555
        %v557 = vsel %vm556, 0, %v555
        %v558 = vsub.s32 32, %v557
        %v559 = vshll.u32 %v550, %v557
        %v560 = vshrl.u32 %v542, %v558
        %v561 = vor.u32 %v559, %v560
        %v562 = vsub.s32 4294967266, %v557
        %v563 = vadd.s32 %v562, 127
        %v564 = vshll.u32 %v563, 23
        %v565 = vor.u32 4788187, %v564
        %v566 = vand.u32 2147483647, %v565
        %v568 = vcvt.s32.f32 %v561
        %v569 = vmul.f32 %v568, %v566
        %v570 = vxor.u32 %v569, 2147483648
        %v571 = vsel %vm488, %v570, %v569
        %v572 = vsub.s32 4, %v548
        %v573 = vsel %vm488, %v572, %v548
        %v574 = vsel %vm487, %v250, %v571
        %v575 = vsel %vm487, 0, %v573
        %v576 = vcosq.f32.pop %v574
        %v577 = vsinq.f32.pop %v574
        %vm578 = vweird.f32 %v250
        %v579 = vadd.s32 %v575, 3
        %v580 = vand.u32 %v579, 3
        %vm581 = vcmp.lt.s32.totalorder %v580, 2
        %vm582 = vcmp.eq.s32.totalorder %v580, 0
        %v583 = vxor.u32 %v577, 2147483648
        %v584 = vsel %vm582, %v576, %v583
        %vm585 = vcmp.eq.s32.totalorder %v580, 2
        %v586 = vxor.u32 %v576, 2147483648
        %v587 = vsel %vm585, %v586, %v577
        %v588 = vsel %vm581, %v584, %v587
        %v589 = vsel %vm578, nan, %v588
        %v590 = vand.u32 2147483647, %v255
        %vm591 = vcmp.le.f32.partialorder %v590, 0.7853982
        %vm592 = vcmp.lt.s32.totalorder %v255, 0
        %v593 = vand.u32 %v255, 2139095040
        %v594 = vshrl.u32 %v593, 23
        %v595 = vsub.s32 %v594, 127
        %v596 = vand.u32 2147483647, %v255
        %v597 = vand.u32 %v596, 8388607
        %v598 = vor.u32 %v597, 8388608
        %v599 = vsub.s32 0, %v598
        %v600 = vadd.s32 %v595, 1
        %vm601 = vcmp.gt.s32.totalorder %v600, 0
        %v602 = vsel %vm601, %v600, 0
        %v603 = vshrl.u32 %v602, 5
        %v604 = vand.u32 %v602, 31
        %v605 = vsub.s32 32, %v604
        %v606 = vshrl.u32 683565275, %v605
        %v607 = vshll.u32 683565275, %v604
        %v608 = vshrl.u32 2475754826, %v605
        %v609 = vor.u32 %v607, %v608
        %v610 = vshll.u32 2475754826, %v604
        %v611 = vshrl.u32 2131351028, %v605
        %v612 = vor.u32 %v610, %v611
        %v613 = vshll.u32 2131351028, %v604
        %v614 = vshrl.u32 2102212464, %v605
        %v615 = vor.u32 %v613, %v614
        %v616 = vshll.u32 2102212464, %v604
        %v617 = vshrl.u32 920167782, %v605
        %v618 = vor.u32 %v616, %v617
        %v619 = vshll.u32 920167782, %v604
        %v620 = vshrl.u32 1326507024, %v605
        %v621 = vor.u32 %v619, %v620
        %vm622 = vcmp.lt.s32.totalorder %v603, 1
        %vm623 = vcmp.lt.s32.totalorder %v603, 2
        %vm624 = vcmp.lt.s32.totalorder %v603, 3
        %vm625 = vcmp.lt.s32.totalorder %v603, 4
        %v626 = vsel %vm622, %v606, %v609
        %v627 = vsel %vm625, %v615, 2102212464
        %v628 = vsel %vm624, %v612, %v627
        %v629 = vsel %vm623, %v626, %v628
        %v630 = vsel %vm622, %v609, %v612
        %v631 = vsel %vm625, %v618, 920167782
        %v632 = vsel %vm624, %v615, %v631
        %v633 = vsel %vm623, %v630, %v632
        %v634 = vsel %vm622, %v612, %v615
        %v635 = vsel %vm625, %v621, 1326507024
        %v636 = vsel %vm624, %v618, %v635
        %v637 = vsel %vm623, %v634, %v636
        %v638 = vshll.u32 %v598, 8
        %v639 = vmul.u32.u64.compose %v638, %v637
        %v640 = vextract.low.u32 %v639
        %v641 = vextract.high.u32 %v639
        %v642 = vmul.u32.u64.compose %v638, %v633
        %v643 = vextract.low.u32 %v642
        %v644 = vextract.high.u32 %v642
        %v645 = vmul.u32 %v638, %v629
        %v646 = vadd.s32 %v641, %v643
        %vm647 = vc.u32 %v641, %v643
        %v648 = vadd.s32 %v644, 1
        %v649 = vsel %vm647, %v648, %v644
        %v650 = vadd.s32 %v645, %v649
        %v651 = vadd.s32 %v650, 536870912
        %v652 = vshrl.u32 %v651, 30
        %v653 = vshll.u32 %v652, 30
        %v654 = vsub.s32 %v650, %v653
        %vm655 = vcmp.lt.s32.totalorder %v654, 0
        %v656 = vsub.s32 0, %v654
        %v657 = vsel %vm655, %v656, %v654
        %v658 = vclz %v657
        %v659 = vsub.s32 %v658, 2
        %vm660 = vcmp.gt.s32.totalorder 0, %v659
        %v661 = vsel %vm660, 0, %v659
        %v662 = vsub.s32 32, %v661
        %v663 = vshll.u32 %v654, %v661
        %v664 = vshrl.u32 %v646, %v662
        %v665 = vor.u32 %v663, %v664
        %v666 = vsub.s32 4294967266, %v661
        %v667 = vadd.s32 %v666, 127
        %v668 = vshll.u32 %v667, 23
        %v669 = vor.u32 4788187, %v668
        %v670 = vand.u32 2147483647, %v669
        %v672 = vcvt.s32.f32 %v665
        %v673 = vmul.f32 %v672, %v670
        %v674 = vxor.u32 %v673, 2147483648
        %v675 = vsel %vm592, %v674, %v673
        %v676 = vsub.s32 4, %v652
        %v677 = vsel %vm592, %v676, %v652
        %v678 = vsel %vm591, %v255, %v675
        %v679 = vsel %vm591, 0, %v677
        %v680 = vcosq.f32.pop %v678
        %v681 = vsinq.f32.pop %v678
        %vm682 = vweird.f32 %v255
        %v683 = vadd.s32 %v679, 3
        %v684 = vand.u32 %v683, 3
        %vm685 = vcmp.lt.s32.totalorder %v684, 2
        %vm686 = vcmp.eq.s32.totalorder %v684, 0
        %v687 = vxor.u32 %v681, 2147483648
        %v688 = vsel %vm686, %v680, %v687
        %vm689 = vcmp.eq.s32.totalorder %v684, 2
        %v690 = vxor.u32 %v680, 2147483648
        %v691 = vsel %vm689, %v690, %v681
        %v692 = vsel %vm685, %v688, %v691
        %v693 = vsel %vm682, nan, %v692
        %v694 = vand.u32 2147483647, %v260
        %vm695 = vcmp.le.f32.partialorder %v694, 0.7853982
        %vm696 = vcmp.lt.s32.totalorder %v260, 0
        %v697 = vand.u32 %v260, 2139095040
        %v698 = vshrl.u32 %v697, 23
        %v699 = vsub.s32 %v698, 127
        %v700 = vand.u32 2147483647, %v260
        %v701 = vand.u32 %v700, 8388607
        %v702 = vor.u32 %v701, 8388608
        %v703 = vsub.s32 0, %v702
        %v704 = vadd.s32 %v699, 1
        %vm705 = vcmp.gt.s32.totalorder %v704, 0
        %v706 = vsel %vm705, %v704, 0
        %v707 = vshrl.u32 %v706, 5
        %v708 = vand.u32 %v706, 31
        %v709 = vsub.s32 32, %v708
        %v710 = vshrl.u32 683565275, %v709
        %v711 = vshll.u32 683565275, %v708
        %v712 = vshrl.u32 2475754826, %v709
        %v713 = vor.u32 %v711, %v712
        %v714 = vshll.u32 2475754826, %v708
        %v715 = vshrl.u32 2131351028, %v709
        %v716 = vor.u32 %v714, %v715
        %v717 = vshll.u32 2131351028, %v708
        %v718 = vshrl.u32 2102212464, %v709
        %v719 = vor.u32 %v717, %v718
        %v720 = vshll.u32 2102212464, %v708
        %v721 = vshrl.u32 920167782, %v709
        %v722 = vor.u32 %v720, %v721
        %v723 = vshll.u32 920167782, %v708
        %v724 = vshrl.u32 1326507024, %v709
        %v725 = vor.u32 %v723, %v724
        %vm726 = vcmp.lt.s32.totalorder %v707, 1
        %vm727 = vcmp.lt.s32.totalorder %v707, 2
        %vm728 = vcmp.lt.s32.totalorder %v707, 3
        %vm729 = vcmp.lt.s32.totalorder %v707, 4
        %v730 = vsel %vm726, %v710, %v713
        %v731 = vsel %vm729, %v719, 2102212464
        %v732 = vsel %vm728, %v716, %v731
        %v733 = vsel %vm727, %v730, %v732
        %v734 = vsel %vm726, %v713, %v716
        %v735 = vsel %vm729, %v722, 920167782
        %v736 = vsel %vm728, %v719, %v735
        %v737 = vsel %vm727, %v734, %v736
        %v738 = vsel %vm726, %v716, %v719
        %v739 = vsel %vm729, %v725, 1326507024
        %v740 = vsel %vm728, %v722, %v739
        %v741 = vsel %vm727, %v738, %v740
        %v742 = vshll.u32 %v702, 8
        %v743 = vmul.u32.u64.compose %v742, %v741
        %v744 = vextract.low.u32 %v743
        %v745 = vextract.high.u32 %v743
        %v746 = vmul.u32.u64.compose %v742, %v737
        %v747 = vextract.low.u32 %v746
        %v748 = vextract.high.u32 %v746
        %v749 = vmul.u32 %v742, %v733
        %v750 = vadd.s32 %v745, %v747
        %vm751 = vc.u32 %v745, %v747
        %v752 = vadd.s32 %v748, 1
        %v753 = vsel %vm751, %v752, %v748
        %v754 = vadd.s32 %v749, %v753
        %v755 = vadd.s32 %v754, 536870912
        %v756 = vshrl.u32 %v755, 30
        %v757 = vshll.u32 %v756, 30
        %v758 = vsub.s32 %v754, %v757
        %vm759 = vcmp.lt.s32.totalorder %v758, 0
        %v760 = vsub.s32 0, %v758
        %v761 = vsel %vm759, %v760, %v758
        %v762 = vclz %v761
        %v763 = vsub.s32 %v762, 2
        %vm764 = vcmp.gt.s32.totalorder 0, %v763
        %v765 = vsel %vm764, 0, %v763
        %v766 = vsub.s32 32, %v765
        %v767 = vshll.u32 %v758, %v765
        %v768 = vshrl.u32 %v750, %v766
        %v769 = vor.u32 %v767, %v768
        %v770 = vsub.s32 4294967266, %v765
        %v771 = vadd.s32 %v770, 127
        %v772 = vshll.u32 %v771, 23
        %v773 = vor.u32 4788187, %v772
        %v774 = vand.u32 2147483647, %v773
        %v776 = vcvt.s32.f32 %v769
        %v777 = vmul.f32 %v776, %v774
        %v778 = vxor.u32 %v777, 2147483648
        %v779 = vsel %vm696, %v778, %v777
        %v780 = vsub.s32 4, %v756
        %v781 = vsel %vm696, %v780, %v756
        %v782 = vsel %vm695, %v260, %v779
        %v783 = vsel %vm695, 0, %v781
        %v784 = vcosq.f32.pop %v782
        %v785 = vsinq.f32.pop %v782
        %vm786 = vweird.f32 %v260
        %v787 = vadd.s32 %v783, 3
        %v788 = vand.u32 %v787, 3
        %vm789 = vcmp.lt.s32.totalorder %v788, 2
        %vm790 = vcmp.eq.s32.totalorder %v788, 0
        %v791 = vxor.u32 %v785, 2147483648
        %v792 = vsel %vm790, %v784, %v791
        %vm793 = vcmp.eq.s32.totalorder %v788, 2
        %v794 = vxor.u32 %v784, 2147483648
        %v795 = vsel %vm793, %v794, %v785
        %v796 = vsel %vm789, %v792, %v795
        %v797 = vsel %vm786, nan, %v796
        %v798 = vand.u32 2147483647, %v265
        %vm799 = vcmp.le.f32.partialorder %v798, 0.7853982
        %vm800 = vcmp.lt.s32.totalorder %v265, 0
        %v801 = vand.u32 %v265, 2139095040
        %v802 = vshrl.u32 %v801, 23
        %v803 = vsub.s32 %v802, 127
        %v804 = vand.u32 2147483647, %v265
        %v805 = vand.u32 %v804, 8388607
        %v806 = vor.u32 %v805, 8388608
        %v807 = vsub.s32 0, %v806
        %v808 = vadd.s32 %v803, 1
        %vm809 = vcmp.gt.s32.totalorder %v808, 0
        %v810 = vsel %vm809, %v808, 0
        %v811 = vshrl.u32 %v810, 5
        %v812 = vand.u32 %v810, 31
        %v813 = vsub.s32 32, %v812
        %v814 = vshrl.u32 683565275, %v813
        %v815 = vshll.u32 683565275, %v812
        %v816 = vshrl.u32 2475754826, %v813
        %v817 = vor.u32 %v815, %v816
        %v818 = vshll.u32 2475754826, %v812
        %v819 = vshrl.u32 2131351028, %v813
        %v820 = vor.u32 %v818, %v819
        %v821 = vshll.u32 2131351028, %v812
        %v822 = vshrl.u32 2102212464, %v813
        %v823 = vor.u32 %v821, %v822
        %v824 = vshll.u32 2102212464, %v812
        %v825 = vshrl.u32 920167782, %v813
        %v826 = vor.u32 %v824, %v825
        %v827 = vshll.u32 920167782, %v812
        %v828 = vshrl.u32 1326507024, %v813
        %v829 = vor.u32 %v827, %v828
        %vm830 = vcmp.lt.s32.totalorder %v811, 1
        %vm831 = vcmp.lt.s32.totalorder %v811, 2
        %vm832 = vcmp.lt.s32.totalorder %v811, 3
        %vm833 = vcmp.lt.s32.totalorder %v811, 4
        %v834 = vsel %vm830, %v814, %v817
        %v835 = vsel %vm833, %v823, 2102212464
        %v836 = vsel %vm832, %v820, %v835
        %v837 = vsel %vm831, %v834, %v836
        %v838 = vsel %vm830, %v817, %v820
        %v839 = vsel %vm833, %v826, 920167782
        %v840 = vsel %vm832, %v823, %v839
        %v841 = vsel %vm831, %v838, %v840
        %v842 = vsel %vm830, %v820, %v823
        %v843 = vsel %vm833, %v829, 1326507024
        %v844 = vsel %vm832, %v826, %v843
        %v845 = vsel %vm831, %v842, %v844
        %v846 = vshll.u32 %v806, 8
        %v847 = vmul.u32.u64.compose %v846, %v845
        %v848 = vextract.low.u32 %v847
        %v849 = vextract.high.u32 %v847
        %v850 = vmul.u32.u64.compose %v846, %v841
        %v851 = vextract.low.u32 %v850
        %v852 = vextract.high.u32 %v850
        %v853 = vmul.u32 %v846, %v837
        %v854 = vadd.s32 %v849, %v851
        %vm855 = vc.u32 %v849, %v851
        %v856 = vadd.s32 %v852, 1
        %v857 = vsel %vm855, %v856, %v852
        %v858 = vadd.s32 %v853, %v857
        %v859 = vadd.s32 %v858, 536870912
        %v860 = vshrl.u32 %v859, 30
        %v861 = vshll.u32 %v860, 30
        %v862 = vsub.s32 %v858, %v861
        %vm863 = vcmp.lt.s32.totalorder %v862, 0
        %v864 = vsub.s32 0, %v862
        %v865 = vsel %vm863, %v864, %v862
        %v866 = vclz %v865
        %v867 = vsub.s32 %v866, 2
        %vm868 = vcmp.gt.s32.totalorder 0, %v867
        %v869 = vsel %vm868, 0, %v867
        %v870 = vsub.s32 32, %v869
        %v871 = vshll.u32 %v862, %v869
        %v872 = vshrl.u32 %v854, %v870
        %v873 = vor.u32 %v871, %v872
        %v874 = vsub.s32 4294967266, %v869
        %v875 = vadd.s32 %v874, 127
        %v876 = vshll.u32 %v875, 23
        %v877 = vor.u32 4788187, %v876
        %v878 = vand.u32 2147483647, %v877
        %v880 = vcvt.s32.f32 %v873
        %v881 = vmul.f32 %v880, %v878
        %v882 = vxor.u32 %v881, 2147483648
        %v883 = vsel %vm800, %v882, %v881
        %v884 = vsub.s32 4, %v860
        %v885 = vsel %vm800, %v884, %v860
        %v886 = vsel %vm799, %v265, %v883
        %v887 = vsel %vm799, 0, %v885
        %v888 = vcosq.f32.pop %v886
        %v889 = vsinq.f32.pop %v886
        %vm890 = vweird.f32 %v265
        %v891 = vadd.s32 %v887, 3
        %v892 = vand.u32 %v891, 3
        %vm893 = vcmp.lt.s32.totalorder %v892, 2
        %vm894 = vcmp.eq.s32.totalorder %v892, 0
        %v895 = vxor.u32 %v889, 2147483648
        %v896 = vsel %vm894, %v888, %v895
        %vm897 = vcmp.eq.s32.totalorder %v892, 2
        %v898 = vxor.u32 %v888, 2147483648
        %v899 = vsel %vm897, %v898, %v889
        %v900 = vsel %vm893, %v896, %v899
        %v901 = vsel %vm890, nan, %v900
        %v902 = vand.u32 2147483647, %v270
        %vm903 = vcmp.le.f32.partialorder %v902, 0.7853982
        %vm904 = vcmp.lt.s32.totalorder %v270, 0
        %v905 = vand.u32 %v270, 2139095040
        %v906 = vshrl.u32 %v905, 23
        %v907 = vsub.s32 %v906, 127
        %v908 = vand.u32 2147483647, %v270
        %v909 = vand.u32 %v908, 8388607
        %v910 = vor.u32 %v909, 8388608
        %v911 = vsub.s32 0, %v910
        %v912 = vadd.s32 %v907, 1
        %vm913 = vcmp.gt.s32.totalorder %v912, 0
        %v914 = vsel %vm913, %v912, 0
        %v915 = vshrl.u32 %v914, 5
        %v916 = vand.u32 %v914, 31
        %v917 = vsub.s32 32, %v916
        %v918 = vshrl.u32 683565275, %v917
        %v919 = vshll.u32 683565275, %v916
        %v920 = vshrl.u32 2475754826, %v917
        %v921 = vor.u32 %v919, %v920
        %v922 = vshll.u32 2475754826, %v916
        %v923 = vshrl.u32 2131351028, %v917
        %v924 = vor.u32 %v922, %v923
        %v925 = vshll.u32 2131351028, %v916
        %v926 = vshrl.u32 2102212464, %v917
        %v927 = vor.u32 %v925, %v926
        %v928 = vshll.u32 2102212464, %v916
        %v929 = vshrl.u32 920167782, %v917
        %v930 = vor.u32 %v928, %v929
        %v931 = vshll.u32 920167782, %v916
        %v932 = vshrl.u32 1326507024, %v917
        %v933 = vor.u32 %v931, %v932
        %vm934 = vcmp.lt.s32.totalorder %v915, 1
        %vm935 = vcmp.lt.s32.totalorder %v915, 2
        %vm936 = vcmp.lt.s32.totalorder %v915, 3
        %vm937 = vcmp.lt.s32.totalorder %v915, 4
        %v938 = vsel %vm934, %v918, %v921
        %v939 = vsel %vm937, %v927, 2102212464
        %v940 = vsel %vm936, %v924, %v939
        %v941 = vsel %vm935, %v938, %v940
        %v942 = vsel %vm934, %v921, %v924
        %v943 = vsel %vm937, %v930, 920167782
        %v944 = vsel %vm936, %v927, %v943
        %v945 = vsel %vm935, %v942, %v944
        %v946 = vsel %vm934, %v924, %v927
        %v947 = vsel %vm937, %v933, 1326507024
        %v948 = vsel %vm936, %v930, %v947
        %v949 = vsel %vm935, %v946, %v948
        %v950 = vshll.u32 %v910, 8
        %v951 = vmul.u32.u64.compose %v950, %v949
        %v952 = vextract.low.u32 %v951
        %v953 = vextract.high.u32 %v951
        %v954 = vmul.u32.u64.compose %v950, %v945
        %v955 = vextract.low.u32 %v954
        %v956 = vextract.high.u32 %v954
        %v957 = vmul.u32 %v950, %v941
        %v958 = vadd.s32 %v953, %v955
        %vm959 = vc.u32 %v953, %v955
        %v960 = vadd.s32 %v956, 1
        %v961 = vsel %vm959, %v960, %v956
        %v962 = vadd.s32 %v957, %v961
        %v963 = vadd.s32 %v962, 536870912
        %v964 = vshrl.u32 %v963, 30
        %v965 = vshll.u32 %v964, 30
        %v966 = vsub.s32 %v962, %v965
        %vm967 = vcmp.lt.s32.totalorder %v966, 0
        %v968 = vsub.s32 0, %v966
        %v969 = vsel %vm967, %v968, %v966
        %v970 = vclz %v969
        %v971 = vsub.s32 %v970, 2
        %vm972 = vcmp.gt.s32.totalorder 0, %v971
        %v973 = vsel %vm972, 0, %v971
        %v974 = vsub.s32 32, %v973
        %v975 = vshll.u32 %v966, %v973
        %v976 = vshrl.u32 %v958, %v974
        %v977 = vor.u32 %v975, %v976
        %v978 = vsub.s32 4294967266, %v973
        %v979 = vadd.s32 %v978, 127
        %v980 = vshll.u32 %v979, 23
        %v981 = vor.u32 4788187, %v980
        %v982 = vand.u32 2147483647, %v981
        %v984 = vcvt.s32.f32 %v977
        %v985 = vmul.f32 %v984, %v982
        %v986 = vxor.u32 %v985, 2147483648
        %v987 = vsel %vm904, %v986, %v985
        %v988 = vsub.s32 4, %v964
        %v989 = vsel %vm904, %v988, %v964
        %v990 = vsel %vm903, %v270, %v987
        %v991 = vsel %vm903, 0, %v989
        %v992 = vcosq.f32.pop %v990
        %v993 = vsinq.f32.pop %v990
        %vm994 = vweird.f32 %v270
        %v995 = vadd.s32 %v991, 3
        %v996 = vand.u32 %v995, 3
        %vm997 = vcmp.lt.s32.totalorder %v996, 2
        %vm998 = vcmp.eq.s32.totalorder %v996, 0
        %v999 = vxor.u32 %v993, 2147483648
        %v1000 = vsel %vm998, %v992, %v999
        %vm1001 = vcmp.eq.s32.totalorder %v996, 2
        %v1002 = vxor.u32 %v992, 2147483648
        %v1003 = vsel %vm1001, %v1002, %v993
        %v1004 = vsel %vm997, %v1000, %v1003
        %v1005 = vsel %vm994, nan, %v1004
        %v1006 = vand.u32 2147483647, %v275
        %vm1007 = vcmp.le.f32.partialorder %v1006, 0.7853982
        %vm1008 = vcmp.lt.s32.totalorder %v275, 0
        %v1009 = vand.u32 %v275, 2139095040
        %v1010 = vshrl.u32 %v1009, 23
        %v1011 = vsub.s32 %v1010, 127
        %v1012 = vand.u32 2147483647, %v275
        %v1013 = vand.u32 %v1012, 8388607
        %v1014 = vor.u32 %v1013, 8388608
        %v1015 = vsub.s32 0, %v1014
        %v1016 = vadd.s32 %v1011, 1
        %vm1017 = vcmp.gt.s32.totalorder %v1016, 0
        %v1018 = vsel %vm1017, %v1016, 0
        %v1019 = vshrl.u32 %v1018, 5
        %v1020 = vand.u32 %v1018, 31
        %v1021 = vsub.s32 32, %v1020
        %v1022 = vshrl.u32 683565275, %v1021
        %v1023 = vshll.u32 683565275, %v1020
        %v1024 = vshrl.u32 2475754826, %v1021
        %v1025 = vor.u32 %v1023, %v1024
        %v1026 = vshll.u32 2475754826, %v1020
        %v1027 = vshrl.u32 2131351028, %v1021
        %v1028 = vor.u32 %v1026, %v1027
        %v1029 = vshll.u32 2131351028, %v1020
        %v1030 = vshrl.u32 2102212464, %v1021
        %v1031 = vor.u32 %v1029, %v1030
        %v1032 = vshll.u32 2102212464, %v1020
        %v1033 = vshrl.u32 920167782, %v1021
        %v1034 = vor.u32 %v1032, %v1033
        %v1035 = vshll.u32 920167782, %v1020
        %v1036 = vshrl.u32 1326507024, %v1021
        %v1037 = vor.u32 %v1035, %v1036
        %vm1038 = vcmp.lt.s32.totalorder %v1019, 1
        %vm1039 = vcmp.lt.s32.totalorder %v1019, 2
        %vm1040 = vcmp.lt.s32.totalorder %v1019, 3
        %vm1041 = vcmp.lt.s32.totalorder %v1019, 4
        %v1042 = vsel %vm1038, %v1022, %v1025
        %v1043 = vsel %vm1041, %v1031, 2102212464
        %v1044 = vsel %vm1040, %v1028, %v1043
        %v1045 = vsel %vm1039, %v1042, %v1044
        %v1046 = vsel %vm1038, %v1025, %v1028
        %v1047 = vsel %vm1041, %v1034, 920167782
        %v1048 = vsel %vm1040, %v1031, %v1047
        %v1049 = vsel %vm1039, %v1046, %v1048
        %v1050 = vsel %vm1038, %v1028, %v1031
        %v1051 = vsel %vm1041, %v1037, 1326507024
        %v1052 = vsel %vm1040, %v1034, %v1051
        %v1053 = vsel %vm1039, %v1050, %v1052
        %v1054 = vshll.u32 %v1014, 8
        %v1055 = vmul.u32.u64.compose %v1054, %v1053
        %v1056 = vextract.low.u32 %v1055
        %v1057 = vextract.high.u32 %v1055
        %v1058 = vmul.u32.u64.compose %v1054, %v1049
        %v1059 = vextract.low.u32 %v1058
        %v1060 = vextract.high.u32 %v1058
        %v1061 = vmul.u32 %v1054, %v1045
        %v1062 = vadd.s32 %v1057, %v1059
        %vm1063 = vc.u32 %v1057, %v1059
        %v1064 = vadd.s32 %v1060, 1
        %v1065 = vsel %vm1063, %v1064, %v1060
        %v1066 = vadd.s32 %v1061, %v1065
        %v1067 = vadd.s32 %v1066, 536870912
        %v1068 = vshrl.u32 %v1067, 30
        %v1069 = vshll.u32 %v1068, 30
        %v1070 = vsub.s32 %v1066, %v1069
        %vm1071 = vcmp.lt.s32.totalorder %v1070, 0
        %v1072 = vsub.s32 0, %v1070
        %v1073 = vsel %vm1071, %v1072, %v1070
        %v1074 = vclz %v1073
        %v1075 = vsub.s32 %v1074, 2
        %vm1076 = vcmp.gt.s32.totalorder 0, %v1075
        %v1077 = vsel %vm1076, 0, %v1075
        %v1078 = vsub.s32 32, %v1077
        %v1079 = vshll.u32 %v1070, %v1077
        %v1080 = vshrl.u32 %v1062, %v1078
        %v1081 = vor.u32 %v1079, %v1080
        %v1082 = vsub.s32 4294967266, %v1077
        %v1083 = vadd.s32 %v1082, 127
        %v1084 = vshll.u32 %v1083, 23
        %v1085 = vor.u32 4788187, %v1084
        %v1086 = vand.u32 2147483647, %v1085
        %v1088 = vcvt.s32.f32 %v1081
        %v1089 = vmul.f32 %v1088, %v1086
        %v1090 = vxor.u32 %v1089, 2147483648
        %v1091 = vsel %vm1008, %v1090, %v1089
        %v1092 = vsub.s32 4, %v1068
        %v1093 = vsel %vm1008, %v1092, %v1068
        %v1094 = vsel %vm1007, %v275, %v1091
        %v1095 = vsel %vm1007, 0, %v1093
        %v1096 = vcosq.f32.pop %v1094
        %v1097 = vsinq.f32.pop %v1094
        %vm1098 = vweird.f32 %v275
        %v1099 = vadd.s32 %v1095, 3
        %v1100 = vand.u32 %v1099, 3
        %vm1101 = vcmp.lt.s32.totalorder %v1100, 2
        %vm1102 = vcmp.eq.s32.totalorder %v1100, 0
        %v1103 = vxor.u32 %v1097, 2147483648
        %v1104 = vsel %vm1102, %v1096, %v1103
        %vm1105 = vcmp.eq.s32.totalorder %v1100, 2
        %v1106 = vxor.u32 %v1096, 2147483648
        %v1107 = vsel %vm1105, %v1106, %v1097
        %v1108 = vsel %vm1101, %v1104, %v1107
        %v1109 = vsel %vm1098, nan, %v1108
        %1110 = vst [vmem:[%s134] sm:$0xff] %v381
        %1111 = vst [vmem:[%s134 + $0x8] sm:$0xff] %v485
        %1112 = vst [vmem:[%s134 + $0x10] sm:$0xff] %v589
        %1113 = vst [vmem:[%s134 + $0x18] sm:$0xff] %v693
        %1114 = vst [vmem:[%s134 + $0x20] sm:$0xff] %v797
        %1115 = vst [vmem:[%s134 + $0x28] sm:$0xff] %v901
        %1116 = vst [vmem:[%s134 + $0x30] sm:$0xff] %v1005
        %1117 = vst [vmem:[%s134 + $0x38] sm:$0xff] %v1109
        %s1118 = sand.u32 %s71, 1
        %s1119 = scalar_lea.sflag [#allocation3], %s1118
        %s1120 = sand.u32 %s71, 1
        %s1121 = smul.addr %s1120, 64
        %s1122 = scalar_lea.vmem [#allocation2], %s1121
        // Predicated region
        $region29: #{lff_forward.1} parent=27 // pred_check
          %p1123 = pneg %p81
        $region30: #{lff_forward.1} parent=27 // pred_check_branch
          %1125 = sbr.rel (%p1123) target = $region32
        $region31: #{lff_forward.1} parent=27 // pred_region
          %s1127 = ssub.s32 1024, 1024
          %1128 = vsyncadd %s1119, %s1127
          %s1129 = smul.addr %s16, 8
          %s1130 = smul.addr %s1129, 128
          %s1131 = scalar_lea.hbm %s2, %s1130
          %s1132 = sshll.u32 %s1122, 4
          %s1133 = int_to_ptr.vmem [resolvable:$true] %s1132
          %1138 = dma.vmem_to_hbm [thread:$0]  %s1133, 1024, %s1131, %s1119, 128, 128, 8
        $region32: #{lff_forward.1} parent=27 // pred_fallthru
          _
      $region28: #{lff_forward.1} parent=5 // pred_fallthru
        _
      %p1139 = scmp.le.s32.totalorder 2, %s11
      // Predicated region
      $region33: #{lff_forward.1} parent=5 // pred_check
        %p1140 = pneg %p1139
      $region34: #{lff_forward.1} parent=5 // pred_check_branch
        %1142 = sbr.rel (%p1140) target = $region36
      $region35: #{lff_forward.1} parent=5 // pred_region
        %s1143 = ssub.s32 %s11, 2
        // Predicated region
        $region37: #{lff_forward.1} parent=35 // pred_check
          %p1144 = pneg %p87
        $region38: #{lff_forward.1} parent=35 // pred_check_branch
          %1146 = sbr.rel (%p1144) target = $region40
        $region39: #{lff_forward.1} parent=35 // pred_region
          %s1147 = sand.u32 %s72, 1
          %s1148 = scalar_lea.sflag [#allocation3], %s1147
          %s1149 = sand.u32 %s72, 1
          %s1150 = smul.addr %s1149, 64
          %s1151 = scalar_lea.vmem [#allocation2], %s1150
          %1152 = dma.done %s1148, 1024
        $region40: #{lff_forward.1} parent=35 // pred_fallthru
          _
      $region36: #{lff_forward.1} parent=5 // pred_fallthru
        _
    $region6: #{lff_forward.1} parent=1 // loop_footer
      %s15 = sadd.s32 1, %s11
    $region7: #{lff_forward.1} parent=1 // loop_footer_branch
      %10 = sbr.rel target = $region3
    $region8: #{lff_forward.1} parent=1 // loop_exit
      _
    %1153 = vsyncpa [#allocation3], 1
    %s1154 = scalar_lea.sflag [#allocation3], 1
    %1155 = vsyncpa %s1154, 1

</llo_original>
